<compile_context>
chip_gen: v7x
topology: tpu7x:2x2x1
jax: 0.10.0
libtpu: 0.0.40
codegen_flags: <defaults>
</compile_context>

<pallas_src>
import numpy as np
import jax
import jax.numpy as jnp
from jax import lax
from jax.experimental import pallas as pl
from jax.experimental.pallas import tpu as pltpu

# ----------------------------- problem sizes --------------------------------
B, C_IN, H, W = 2, 4, 16, 16        # input  (PyTorch NCHW): [2, 4, 16, 16]
C_OUT, KH, KW = 8, 3, 3             # Conv2d(4, 8, kernel_size=3, padding=1)
PAD = 1
K_DIM = C_IN * KH * KW              # 36  (im2col contraction dim)
N_DIM = B * H * W                   # 512 (lane-dense output dim, 4 x 128)


# ------------------------------- kernel -------------------------------------
def conv_im2col_kernel(w_ref, p_ref, b_ref, o_ref):
    """Single grid step: one MXU matmul for the whole batch.

    w_ref : (C_OUT, K_DIM)   = (8, 36)   conv weights flattened (i, kh, kw)
    p_ref : (K_DIM, N_DIM)   = (36, 512) im2col patches, (b, h, w) on lanes
    b_ref : (C_OUT, 1)       = (8, 1)    bias (broadcast along lanes)
    o_ref : (C_OUT, N_DIM)   = (8, 512)  lane-dense output
    """
    acc = jnp.dot(w_ref[...], p_ref[...], preferred_element_type=jnp.float32)
    o_ref[...] = (acc + b_ref[...]).astype(o_ref.dtype)


# ------------------------------- wrapper -------------------------------------
@jax.jit
def base_forward(x_nchw, weight_oihw, bias):
    """Equivalent of Base.forward(x) with self.model = Conv2d(C_IN, C_OUT, 3, padding=1).

    x_nchw      : (B, C_IN, H, W)      float32
    weight_oihw : (C_OUT, C_IN, 3, 3)  float32 (PyTorch layout)
    bias        : (C_OUT,)             float32
    returns     : (B, C_OUT, H, W)     float32
    """
    # --- im2col (layout plumbing, fused under jit) ---------------------------
    x_pad = jnp.pad(x_nchw, ((0, 0), (0, 0), (PAD, PAD), (PAD, PAD)))  # SAME pad
    taps = [x_pad[:, :, kh:kh + H, kw:kw + W]        # each (B, C_IN, H, W)
            for kh in range(KH) for kw in range(KW)]
    patches = jnp.stack(taps, axis=0)                # (KH*KW, B, C_IN, H, W)
    patches = jnp.transpose(patches, (2, 0, 1, 3, 4))  # (C_IN, KH*KW, B, H, W)
    patches = patches.reshape(K_DIM, N_DIM)          # (36, 512)

    w_mat = weight_oihw.reshape(C_OUT, K_DIM)        # (8, 36) K-order = (i, kh, kw)
    b2d = bias.reshape(C_OUT, 1)                     # (8, 1)

    out_mat = pl.pallas_call(
        conv_im2col_kernel,
        out_shape=jax.ShapeDtypeStruct((C_OUT, N_DIM), x_nchw.dtype),
        grid_spec=pltpu.PrefetchScalarGridSpec(
            num_scalar_prefetch=0,
            grid=(1,),                               # single step: no pipelining overhead
            in_specs=[
                pl.BlockSpec((C_OUT, K_DIM), lambda i: (0, 0)),
                pl.BlockSpec((K_DIM, N_DIM), lambda i: (0, 0)),
                pl.BlockSpec((C_OUT, 1), lambda i: (0, 0)),
            ],
            out_specs=pl.BlockSpec((C_OUT, N_DIM), lambda i: (0, 0)),
        ),
        compiler_params=pltpu.CompilerParams(
            dimension_semantics=("arbitrary",)),
    )(w_mat, patches, b2d)

    # (C_OUT, B*H*W) -> (B, C_OUT, H, W)
    out = out_mat.reshape(C_OUT, B, H, W)
    return jnp.transpose(out, (1, 0, 2, 3))


# -------------------------- deterministic params ------------------------------
def init_conv_params(key):
    """Base._init_weight semantics for a Conv layer."""
    weight_shape = (C_OUT, C_IN, KH, KW)
    fan_in = np.prod(weight_shape[1:4])
    fan_out = np.prod(weight_shape[2:4]) * weight_shape[0]
    w_bound = float(np.sqrt(6.0 / (fan_in + fan_out)))
    weight = jax.random.uniform(key, weight_shape, dtype=jnp.float32,
                                minval=-w_bound, maxval=w_bound)
    bias = jnp.zeros((C_OUT,), dtype=jnp.float32)
    return weight, bias


if __name__ == "__main__":
    key = jax.random.PRNGKey(0)
    k_x, k_w = jax.random.split(key)

    x = jax.random.normal(k_x, (B, C_IN, H, W), dtype=jnp.float32)
    weight, bias = init_conv_params(k_w)

    out = base_forward(x, weight, bias)
    out = jax.block_until_ready(out)

    # reference check against XLA conv (PyTorch NCHW / OIHW semantics)
    ref = lax.conv_general_dilated(
        x, weight, window_strides=(1, 1), padding="SAME",
        dimension_numbers=("NCHW", "OIHW", "NCHW")) + bias.reshape(1, C_OUT, 1, 1)
    assert out.shape == (B, C_OUT, H, W)
    assert jnp.allclose(out, ref, atol=1e-4, rtol=1e-4)

    print("KERNEL_OK")
</pallas_src>

<mosaic_0001>
module attributes {stable_mosaic.version = 11 : i64} {
  func.func @conv_im2col_kernel(%arg0: i32, %arg1: memref<8x36xf32, #tpu.memory_space<vmem>>, %arg2: memref<36x512xf32, #tpu.memory_space<vmem>>, %arg3: memref<8x1xf32, #tpu.memory_space<vmem>>, %arg4: memref<8x512xf32, #tpu.memory_space<vmem>>) attributes {dimension_semantics = [#tpu.dimension_semantics<arbitrary>], iteration_bounds = array<i64: 1>, scalar_prefetch = 0 : i64, scratch_operands = 0 : i64, tpu.core_type = #tpu.core_type<tc>, window_params = [{pipeline_mode = #tpu.pipeline_mode<synchronous>, transform_indices = @transform_0, window_bounds = array<i64: 8, 36>}, {pipeline_mode = #tpu.pipeline_mode<synchronous>, transform_indices = @transform_1, window_bounds = array<i64: 36, 512>}, {pipeline_mode = #tpu.pipeline_mode<synchronous>, transform_indices = @transform_2, window_bounds = array<i64: 8, 1>}, {pipeline_mode = #tpu.pipeline_mode<synchronous>, transform_indices = @transform_3, window_bounds = array<i64: 8, 512>}]} {
    %c0 = arith.constant 0 : index
    %c0_0 = arith.constant 0 : index
    %0 = vector.load %arg1[%c0, %c0_0] : memref<8x36xf32, #tpu.memory_space<vmem>>, vector<8x36xf32>
    %c0_1 = arith.constant 0 : index
    %c0_2 = arith.constant 0 : index
    %1 = vector.load %arg2[%c0_1, %c0_2] : memref<36x512xf32, #tpu.memory_space<vmem>>, vector<36x512xf32>
    %cst = arith.constant dense<0.000000e+00> : vector<8x512xf32>
    %2 = tpu.matmul %0, %1, %cst {dimension_numbers = #tpu.dot_dimension_numbers<[1], [0], [0], [1], [0, 0, 1, 1], [], []>} : vector<8x36xf32>, vector<36x512xf32>, vector<8x512xf32> -> vector<8x512xf32>
    %c0_3 = arith.constant 0 : index
    %c0_4 = arith.constant 0 : index
    %3 = vector.load %arg3[%c0_3, %c0_4] : memref<8x1xf32, #tpu.memory_space<vmem>>, vector<8x1xf32>
    %4 = vector.broadcast %3 : vector<8x1xf32> to vector<8x512xf32>
    %5 = arith.addf %2, %4 : vector<8x512xf32>
    %c0_5 = arith.constant 0 : index
    %c0_6 = arith.constant 0 : index
    %6 = vector.load %arg4[%c0_5, %c0_6] : memref<8x512xf32, #tpu.memory_space<vmem>>, vector<8x512xf32>
    tpu.vector_store %arg4[%c0_5, %c0_6], %5 {strides = array<i32>} : memref<8x512xf32, #tpu.memory_space<vmem>>, vector<8x512xf32>,
    return
  }
  func.func @transform_0(%arg0: i32) -> (i32, i32) {
    %c0_i32 = arith.constant 0 : i32
    %c0_i32_0 = arith.constant 0 : i32
    %c0_i32_1 = arith.constant 0 : i32
    return %c0_i32, %c0_i32_0 : i32, i32
  }
  func.func @transform_1(%arg0: i32) -> (i32, i32) {
    %c0_i32 = arith.constant 0 : i32
    %c0_i32_0 = arith.constant 0 : i32
    %c0_i32_1 = arith.constant 0 : i32
    return %c0_i32, %c0_i32_0 : i32, i32
  }
  func.func @transform_2(%arg0: i32) -> (i32, i32) {
    %c0_i32 = arith.constant 0 : i32
    %c0_i32_0 = arith.constant 0 : i32
    %c0_i32_1 = arith.constant 0 : i32
    return %c0_i32, %c0_i32_0 : i32, i32
  }
  func.func @transform_3(%arg0: i32) -> (i32, i32) {
    %c0_i32 = arith.constant 0 : i32
    %c0_i32_0 = arith.constant 0 : i32
    %c0_i32_1 = arith.constant 0 : i32
    return %c0_i32, %c0_i32_0 : i32, i32
  }
}

</mosaic_0001>

<llo_original>
// kernel: base_forward.1
$region0: #{base_forward.1}
  #allocation0 [shape = 'u32[]', space=smem, size = 0x4, offset = 0x4, fixed_abs, tag = 'smem constant byte address 0x4 - core index']
  #allocation1 [shape = 'u32[144,128]{1,0:T(1,128)}', space=vmem, size = 0x12000, scoped, tag = 'internal scratch']
  %s0 = inlined_call_operand.vmem [shape: f32[8,36], index: 0, kind: input, shape index: {}]
  %s1 = inlined_call_operand.vmem [shape: f32[36,512], index: 1, kind: input, shape index: {}]
  %s2 = inlined_call_operand.vmem [shape: f32[8,1], index: 2, kind: input, shape index: {}]
  %s3 = inlined_call_operand.vmem [shape: f32[8,512], index: 3, kind: output, shape index: {}]
  %s4 = sld [smem:[#allocation0]]
  $region22: #{base_forward.1} parent=0
    _
  %s6 = ssub.s32 1, %s4
  %s7 = scalar_select 0, %s6, %s4
  // Predicated region
  $region2: #{base_forward.1} parent=0 // pred_check
    _
  $region3: #{base_forward.1} parent=0 // pred_check_branch
    %9 = sbr.rel (0) target = $region5
  $region4: #{base_forward.1} parent=0 // pred_region
    _
  $region5: #{base_forward.1} parent=0 // pred_fallthru
    _
  // Predicated region
  $region6: #{base_forward.1} parent=0 // pred_check
    _
  $region7: #{base_forward.1} parent=0 // pred_check_branch
    %11 = sbr.rel (0) target = $region9
  $region8: #{base_forward.1} parent=0 // pred_region
    _
  $region9: #{base_forward.1} parent=0 // pred_fallthru
    _
  // Predicated region
  $region10: #{base_forward.1} parent=0 // pred_check
    _
  $region11: #{base_forward.1} parent=0 // pred_check_branch
    %13 = sbr.rel (0) target = $region13
  $region12: #{base_forward.1} parent=0 // pred_region
    _
  $region13: #{base_forward.1} parent=0 // pred_fallthru
    _
  %v14 = vld [vmem:[%s0] sm:$0xff]
  %v15 = vld [vmem:[%s1] sm:$0xff]
  %v16 = vld [vmem:[%s1 + $0x8] sm:$0xff]
  %v17 = vld [vmem:[%s1 + $0x10] sm:$0xff]
  %v18 = vld [vmem:[%s1 + $0x18] sm:$0xff]
  %v19 = vld [vmem:[%s1 + $0x20] sm:$0xff]
  %v20 = vld [vmem:[%s1 + $0x28] sm:$0xff]
  %v21 = vld [vmem:[%s1 + $0x30] sm:$0xff]
  %v22 = vld [vmem:[%s1 + $0x38] sm:$0xff]
  %v23 = vld [vmem:[%s1 + $0x40] sm:$0xff]
  %v24 = vld [vmem:[%s1 + $0x48] sm:$0xff]
  %v25 = vld [vmem:[%s1 + $0x50] sm:$0xff]
  %v26 = vld [vmem:[%s1 + $0x58] sm:$0xff]
  %v27 = vld [vmem:[%s1 + $0x60] sm:$0xff]
  %v28 = vld [vmem:[%s1 + $0x68] sm:$0xff]
  %v29 = vld [vmem:[%s1 + $0x70] sm:$0xff]
  %v30 = vld [vmem:[%s1 + $0x78] sm:$0xff]
  %v31 = vld [vmem:[%s1 + $0x80] sm:$0xf]
  %v32 = vld [vmem:[%s1 + $0x88] sm:$0xf]
  %v33 = vld [vmem:[%s1 + $0x90] sm:$0xf]
  %v34 = vld [vmem:[%s1 + $0x98] sm:$0xf]
  %v35 = vld [vmem:[%s2] sm:$0xff]
  %37 = vset.pattern.permute.xlu0 0
  %38 = vperm.xlu0 %37, %v35
  %v39 = vpop.permute.xlu0 %38
  %vm41 = vcmask 293888
  %v43 = vsel %vm41, %v14, 0
  %vm45 = vcmask 1043456
  %v47 = vsel %vm45, %v31, 0
  %v50 = vsel %vm45, %v32, 0
  %v53 = vsel %vm45, %v33, 0
  %v56 = vsel %vm45, %v34, 0
  %58 = vmatprep.subr.mxu0 %v16
  %59 = vmatpush1.msra.mxu0 %v15
  %60 = vmatprep.subr.mxu0 %v20
  %61 = vmatpush1.msra.mxu0 %v19
  %62 = vmatprep.subr.mxu0 %v24
  %63 = vmatpush1.msra.mxu0 %v23
  %64 = vmatprep.subr.mxu0 %v28
  %65 = vmatpush1.msra.mxu0 %v27
  %66 = vmatprep.subr.mxu0 %v50
  %67 = vmatpush1.msra.mxu0 %v47
  %68 = vmatprep.subr.mxu0 0.0
  %69 = vmatpush1.msra.mxu0 0.0
  %70 = vmatprep.subr.mxu0 0.0
  %71 = vmatpush1.msra.mxu0 0.0
  %72 = vmatprep.subr.mxu0 0.0
  %73 = vmatpush1.msra.mxu0 0.0
  %74 = vmatprep.subr.mxu0 0.0
  %75 = vmatpush1.msra.mxu0 0.0
  %76 = vmatprep.subr.mxu0 0.0
  %77 = vmatpush1.msra.mxu0 0.0
  %78 = vmatprep.subr.mxu0 0.0
  %79 = vmatpush1.msra.mxu0 0.0
  %80 = vmatprep.subr.mxu0 0.0
  %81 = vmatpush1.msra.mxu0 0.0
  %82 = vmatprep.subr.mxu0 0.0
  %83 = vmatpush1.msra.mxu0 0.0
  %84 = vmatprep.subr.mxu0 0.0
  %85 = vmatpush1.msra.mxu0 0.0
  %86 = vmatprep.subr.mxu0 0.0
  %87 = vmatpush1.msra.mxu0 0.0
  %88 = vmatprep.subr.mxu0 0.0
  %89 = vmatpush1.msra.mxu0 0.0
  %90 = vmatprep.subr.mxu0 0.0
  %91 = vmatpush1.msra.mxu0 0.0
  %92 = vmatprep.subr.mxu0 0.0
  %93 = vmatpush1.msra.mxu0 0.0
  %94 = vmatprep.subr.mxu0 0.0
  %95 = vmatpush1.msra.mxu0 0.0
  %96 = vmatprep.subr.mxu0 0.0
  %97 = vmatpush1.msra.mxu0 0.0
  %98 = vmatprep.subr.mxu0 0.0
  %99 = vmatpush1.msra.mxu0 0.0
  %100 = vmatprep.subr.mxu0 0.0
  %101 = vmatpush1.msra.mxu0 0.0
  %102 = vmatprep.subr.mxu0 0.0
  %103 = vmatpush1.msra.mxu0 0.0
  %104 = vmatprep.subr.mxu0 0.0
  %105 = vmatpush1.msra.mxu0 0.0
  %106 = vmatprep.subr.mxu0 0.0
  %107 = vmatpush1.msra.mxu0 0.0
  %108 = vmatprep.subr.mxu0 0.0
  %109 = vmatpush1.msra.mxu0 0.0
  %110 = vmatprep.subr.mxu0 0.0
  %111 = vmatpush1.msra.mxu0 0.0
  %112 = vmatprep.subr.mxu0 0.0
  %113 = vmatpush1.msra.mxu0 0.0
  %114 = vmatprep.subr.mxu0 0.0
  %115 = vmatpush1.msra.mxu0 0.0
  %116 = vmatprep.subr.mxu0 0.0
  %117 = vmatpush1.msra.mxu0 0.0
  %118 = vmatprep.subr.mxu0 0.0
  %119 = vmatpush1.msra.mxu0 0.0
  %120 = vmatprep.subr.mxu0 0.0
  %121 = vmatpush1.msra.mxu0 0.0
  %122 = vmatprep.mubr.f32.mxu0 0.0
  %123 = vmatmul.mubr.f32.gmra.mrb[0].mxu0 %v43
  %v124 = vpop.f32.mrb[0].mxu0
  %v125 = vadd.f32 %v39, %v124
  %v126 = vpop.f32.mrb[0].mxu0
  %v127 = vadd.f32 %v39, %v126
  %128 = vdwg.mxu0
  %129 = vmatprep.subr.mxu0 %v18
  %130 = vmatpush1.msra.mxu0 %v17
  %131 = vmatprep.subr.mxu0 %v22
  %132 = vmatpush1.msra.mxu0 %v21
  %133 = vmatprep.subr.mxu0 %v26
  %134 = vmatpush1.msra.mxu0 %v25
  %135 = vmatprep.subr.mxu0 %v30
  %136 = vmatpush1.msra.mxu0 %v29
  %137 = vmatprep.subr.mxu0 %v56
  %138 = vmatpush1.msra.mxu0 %v53
  %139 = vmatprep.subr.mxu0 0.0
  %140 = vmatpush1.msra.mxu0 0.0
  %141 = vmatprep.subr.mxu0 0.0
  %142 = vmatpush1.msra.mxu0 0.0
  %143 = vmatprep.subr.mxu0 0.0
  %144 = vmatpush1.msra.mxu0 0.0
  %145 = vmatprep.subr.mxu0 0.0
  %146 = vmatpush1.msra.mxu0 0.0
  %147 = vmatprep.subr.mxu0 0.0
  %148 = vmatpush1.msra.mxu0 0.0
  %149 = vmatprep.subr.mxu0 0.0
  %150 = vmatpush1.msra.mxu0 0.0
  %151 = vmatprep.subr.mxu0 0.0
  %152 = vmatpush1.msra.mxu0 0.0
  %153 = vmatprep.subr.mxu0 0.0
  %154 = vmatpush1.msra.mxu0 0.0
  %155 = vmatprep.subr.mxu0 0.0
  %156 = vmatpush1.msra.mxu0 0.0
  %157 = vmatprep.subr.mxu0 0.0
  %158 = vmatpush1.msra.mxu0 0.0
  %159 = vmatprep.subr.mxu0 0.0
  %160 = vmatpush1.msra.mxu0 0.0
  %161 = vmatprep.subr.mxu0 0.0
  %162 = vmatpush1.msra.mxu0 0.0
  %163 = vmatprep.subr.mxu0 0.0
  %164 = vmatpush1.msra.mxu0 0.0
  %165 = vmatprep.subr.mxu0 0.0
  %166 = vmatpush1.msra.mxu0 0.0
  %167 = vmatprep.subr.mxu0 0.0
  %168 = vmatpush1.msra.mxu0 0.0
  %169 = vmatprep.subr.mxu0 0.0
  %170 = vmatpush1.msra.mxu0 0.0
  %171 = vmatprep.subr.mxu0 0.0
  %172 = vmatpush1.msra.mxu0 0.0
  %173 = vmatprep.subr.mxu0 0.0
  %174 = vmatpush1.msra.mxu0 0.0
  %175 = vmatprep.subr.mxu0 0.0
  %176 = vmatpush1.msra.mxu0 0.0
  %177 = vmatprep.subr.mxu0 0.0
  %178 = vmatpush1.msra.mxu0 0.0
  %179 = vmatprep.subr.mxu0 0.0
  %180 = vmatpush1.msra.mxu0 0.0
  %181 = vmatprep.subr.mxu0 0.0
  %182 = vmatpush1.msra.mxu0 0.0
  %183 = vmatprep.subr.mxu0 0.0
  %184 = vmatpush1.msra.mxu0 0.0
  %185 = vmatprep.subr.mxu0 0.0
  %186 = vmatpush1.msra.mxu0 0.0
  %187 = vmatprep.subr.mxu0 0.0
  %188 = vmatpush1.msra.mxu0 0.0
  %189 = vmatprep.subr.mxu0 0.0
  %190 = vmatpush1.msra.mxu0 0.0
  %191 = vmatprep.subr.mxu0 0.0
  %192 = vmatpush1.msra.mxu0 0.0
  %193 = vmatprep.mubr.f32.mxu0 0.0
  %194 = vmatmul.mubr.f32.gmra.mrb[0].mxu0 %v43
  %v195 = vpop.f32.mrb[0].mxu0
  %v196 = vadd.f32 %v39, %v195
  %v197 = vpop.f32.mrb[0].mxu0
  %v198 = vadd.f32 %v39, %v197
  %199 = vdwg.mxu0
  %200 = vst [vmem:[%s3] sm:$0xff] %v125
  %201 = vst [vmem:[%s3 + $0x8] sm:$0xff] %v127
  %202 = vst [vmem:[%s3 + $0x10] sm:$0xff] %v196
  %203 = vst [vmem:[%s3 + $0x18] sm:$0xff] %v198
  // Predicated region
  $region14: #{base_forward.1} parent=0 // pred_check
    _
  $region15: #{base_forward.1} parent=0 // pred_check_branch
    %205 = sbr.rel (0) target = $region17
  $region16: #{base_forward.1} parent=0 // pred_region
    _
  $region17: #{base_forward.1} parent=0 // pred_fallthru
    _
  // Predicated region
  $region18: #{base_forward.1} parent=0 // pred_check
    _
  $region19: #{base_forward.1} parent=0 // pred_check_branch
    %207 = sbr.rel (0) target = $region21
  $region20: #{base_forward.1} parent=0 // pred_region
    _
  $region21: #{base_forward.1} parent=0 // pred_fallthru
    _

</llo_original>
